<compile_context>
chip_gen: v6e
topology: v6e:2x2x1
jax: 0.10.0
libtpu: 0.0.40
codegen_flags: <defaults>
</compile_context>

<pallas_src>
import math

import jax
import jax.numpy as jnp
import numpy as np
from jax import lax
from jax.experimental import pallas as pl
from jax.experimental.pallas import tpu as pltpu

_CONV_KS = (3, 5, 7)
_CONV_PADS = (1, 2, 3)
_INV_SQRT2 = 1.0 / math.sqrt(2.0)


# ----------------------------------------------------------------------------- kernel
def _encoder_kernel(x_ref,
                    w1_ref, t1_ref,
                    w2_ref, t2_ref,
                    w3_ref, t3_ref,
                    wp1a_ref, wp1m_ref, bp1_ref,
                    wp2_ref, bp2_ref,
                    out_ref):
    # x block: (TB, L, Cin)
    h = x_ref[...].astype(jnp.float32)
    TB, L, _ = h.shape

    def conv_bn_gelu(h, w_ref, t_ref, K, pad):
        # w_ref: (K*Cin, Cout) bf16, BN scale folded in.
        # t_ref: (1, Cout) f32 shift = conv_bias * bn_scale + bn_shift.
        _, _, Cin = h.shape
        Cout = w_ref.shape[-1]
        hb = h.astype(jnp.bfloat16)
        zpad = jnp.zeros((TB, pad, Cin), jnp.bfloat16)
        hp = jnp.concatenate([zpad, hb, zpad], axis=1)            # (TB, L+2p, Cin)
        # im2col: column index = k*Cin + cin, matching the host weight packing.
        cols = jnp.concatenate([hp[:, k:k + L, :] for k in range(K)], axis=-1)
        y = jnp.dot(cols.reshape(TB * L, K * Cin), w_ref[...],
                    preferred_element_type=jnp.float32)           # (TB*L, Cout) f32
        y = y + t_ref[...]                                        # folded bias + BN
        y = 0.5 * y * (1.0 + lax.erf(y * _INV_SQRT2))             # exact GELU (f32)
        return y.reshape(TB, L, Cout)                             # dropout = identity

    h = conv_bn_gelu(h, w1_ref, t1_ref, _CONV_KS[0], _CONV_PADS[0])
    h = conv_bn_gelu(h, w2_ref, t2_ref, _CONV_KS[1], _CONV_PADS[1])
    h = conv_bn_gelu(h, w3_ref, t3_ref, _CONV_KS[2], _CONV_PADS[2])

    avg = jnp.mean(h, axis=1)                                     # (TB, D)
    mx = jnp.max(h, axis=1)                                       # (TB, D)

    # projection: concat([avg, max]) @ wp1 == avg @ wp1_avg + max @ wp1_max
    p = (jnp.dot(avg.astype(jnp.bfloat16), wp1a_ref[...],
                 preferred_element_type=jnp.float32)
         + jnp.dot(mx.astype(jnp.bfloat16), wp1m_ref[...],
                   preferred_element_type=jnp.float32)
         + bp1_ref[...])
    p = jnp.maximum(p, 0.0)                                       # ReLU; dropout = id
    o = jnp.dot(p.astype(jnp.bfloat16), wp2_ref[...],
                preferred_element_type=jnp.float32) + bp2_ref[...]
    out_ref[...] = o.astype(out_ref.dtype)


# ----------------------------------------------------------------------------- wrapper
def time_series_covariate_encoder(x, packed, *, batch_block=8):
    """x: [B, L, Cin] float32 -> [B, d_model] float32 (inference)."""
    B, L, Cin = x.shape
    d_model = packed["wp2"].shape[1]

    TB = min(B, batch_block)
    Bp = ((B + TB - 1) // TB) * TB
    if Bp != B:
        x = jnp.concatenate([x, jnp.zeros((Bp - B, L, Cin), x.dtype)], axis=0)

    order = ["w1", "t1", "w2", "t2", "w3", "t3",
             "wp1a", "wp1m", "bp1", "wp2", "bp2"]

    def full_spec(arr):
        nd = arr.ndim
        return pl.BlockSpec(arr.shape, lambda b, _nd=nd: (0,) * _nd)

    in_specs = [pl.BlockSpec((TB, L, Cin), lambda b: (b, 0, 0))]
    in_specs += [full_spec(packed[k]) for k in order]
    out_spec = pl.BlockSpec((TB, d_model), lambda b: (b, 0))

    f = pl.pallas_call(
        _encoder_kernel,
        out_shape=jax.ShapeDtypeStruct((Bp, d_model), jnp.float32),
        grid_spec=pltpu.PrefetchScalarGridSpec(
            num_scalar_prefetch=0,
            grid=(Bp // TB,),
            in_specs=in_specs,
            out_specs=out_spec,
        ),
        compiler_params=pltpu.CompilerParams(
            dimension_semantics=("parallel",),          # 2 TCs on v7x; neutral elsewhere
            vmem_limit_bytes=32 * 1024 * 1024),
    )
    out = f(x, *[packed[k] for k in order])
    return out[:B]


# ----------------------------------------------------------------------------- params
def init_params(key, in_channels, d_model):
    ks = jax.random.split(key, 24)
    ki = iter(range(len(ks)))

    def conv_params(cin, cout, k):
        # PyTorch Conv1d weight layout is [Cout, Cin, K]; transpose to [K, Cin, Cout].
        w_pt = jax.random.normal(ks[next(ki)], (cout, cin, k), jnp.float32)
        w_pt = w_pt / math.sqrt(cin * k)
        w = jnp.transpose(w_pt, (2, 1, 0))
        b = 0.05 * jax.random.normal(ks[next(ki)], (1, cout), jnp.float32)
        return w, b

    def bn_params(c):
        gamma = 1.0 + 0.1 * jax.random.normal(ks[next(ki)], (1, c), jnp.float32)
        beta = 0.1 * jax.random.normal(ks[next(ki)], (1, c), jnp.float32)
        mean = 0.05 * jax.random.normal(ks[next(ki)], (1, c), jnp.float32)
        var = 1.0 + 0.1 * jnp.abs(jax.random.normal(ks[next(ki)], (1, c), jnp.float32))
        scale = gamma / jnp.sqrt(var + 1e-5)
        shift = beta - mean * scale
        return scale, shift

    c1, c2, c3 = d_model // 4, d_model // 2, d_model
    w1, b1 = conv_params(in_channels, c1, 3)
    s1, t1 = bn_params(c1)
    w2, b2 = conv_params(c1, c2, 5)
    s2, t2 = bn_params(c2)
    w3, b3 = conv_params(c2, c3, 7)
    s3, t3 = bn_params(c3)

    wp1 = jax.random.normal(ks[next(ki)], (2 * d_model, d_model), jnp.float32) / math.sqrt(2 * d_model)
    bp1 = 0.05 * jax.random.normal(ks[next(ki)], (1, d_model), jnp.float32)
    wp2 = jax.random.normal(ks[next(ki)], (d_model, d_model), jnp.float32) / math.sqrt(d_model)
    bp2 = 0.05 * jax.random.normal(ks[next(ki)], (1, d_model), jnp.float32)

    return dict(w1=w1, b1=b1, s1=s1, t1=t1,
                w2=w2, b2=b2, s2=s2, t2=t2,
                w3=w3, b3=b3, s3=s3, t3=t3,
                wp1=wp1, bp1=bp1, wp2=wp2, bp2=bp2)


def pack_params(params):
    """Host-side folding: BN scale into conv weights (im2col-packed, bf16),
    conv bias + BN shift into one per-channel shift, wp1 split into avg/max."""
    packed = {}
    for i in (1, 2, 3):
        W = params[f"w{i}"]                      # (K, Cin, Cout)
        s = params[f"s{i}"]                      # (1, Cout)
        t = params[f"t{i}"]                      # (1, Cout)
        b = params[f"b{i}"]                      # (1, Cout)
        K, Cin, Cout = W.shape
        Wf = (W * s).reshape(K * Cin, Cout)      # row index = k*Cin + cin
        packed[f"w{i}"] = Wf.astype(jnp.bfloat16)
        packed[f"t{i}"] = (b * s + t).astype(jnp.float32)
    D = params["wp2"].shape[1]
    packed["wp1a"] = params["wp1"][:D].astype(jnp.bfloat16)
    packed["wp1m"] = params["wp1"][D:].astype(jnp.bfloat16)
    packed["bp1"] = params["bp1"].astype(jnp.float32)
    packed["wp2"] = params["wp2"].astype(jnp.bfloat16)
    packed["bp2"] = params["bp2"].astype(jnp.float32)
    return packed


# ----------------------------------------------------------------------------- plain-JAX reference
def reference(x, params):
    B, L, Cin = x.shape

    def conv_bn_gelu(h, W, b, s, t, pad):
        hp = jnp.pad(h, ((0, 0), (pad, pad), (0, 0)))
        K = W.shape[0]
        acc = jnp.zeros((B, L, W.shape[2]), jnp.float32)
        for k in range(K):
            acc = acc + jnp.einsum("blc,cd->bld", hp[:, k:k + L, :], W[k])
        y = acc + b[None]
        y = y * s[None] + t[None]
        return 0.5 * y * (1.0 + lax.erf(y / math.sqrt(2.0)))

    h = conv_bn_gelu(x, params["w1"], params["b1"], params["s1"], params["t1"], 1)
    h = conv_bn_gelu(h, params["w2"], params["b2"], params["s2"], params["t2"], 2)
    h = conv_bn_gelu(h, params["w3"], params["b3"], params["s3"], params["t3"], 3)
    avg = jnp.mean(h, axis=1)
    mx = jnp.max(h, axis=1)
    pooled = jnp.concatenate([avg, mx], axis=1)
    p = jnp.maximum(pooled @ params["wp1"] + params["bp1"], 0.0)
    return p @ params["wp2"] + params["bp2"]


# ----------------------------------------------------------------------------- main
if __name__ == "__main__":
    B, L, Cin, D = 2, 16, 4, 32   # batch, seq_len, in_channels, d_model

    key = jax.random.PRNGKey(0)
    kx, kp = jax.random.split(key)
    x = jax.random.normal(kx, (B, L, Cin), jnp.float32)
    params = init_params(kp, Cin, D)
    packed = pack_params(params)

    out = time_series_covariate_encoder(x, packed)
    out = jax.block_until_ready(out)
    assert out.shape == (B, D), out.shape

    ref = reference(x, params)
    if not np.allclose(np.asarray(out), np.asarray(ref), rtol=3e-2, atol=3e-2):
        err = float(np.max(np.abs(np.asarray(out) - np.asarray(ref))))
        raise AssertionError(f"Pallas kernel output does not match reference (max abs err {err})")

    print("KERNEL_OK")
</pallas_src>

<mosaic_0001>
module attributes {stable_mosaic.version = 11 : i64} {
  func.func @_encoder_kernel(%arg0: i32, %arg1: memref<2x16x4xf32, #tpu.memory_space<vmem>>, %arg2: memref<12x8xbf16, #tpu.memory_space<vmem>>, %arg3: memref<1x8xf32, #tpu.memory_space<vmem>>, %arg4: memref<40x16xbf16, #tpu.memory_space<vmem>>, %arg5: memref<1x16xf32, #tpu.memory_space<vmem>>, %arg6: memref<112x32xbf16, #tpu.memory_space<vmem>>, %arg7: memref<1x32xf32, #tpu.memory_space<vmem>>, %arg8: memref<32x32xbf16, #tpu.memory_space<vmem>>, %arg9: memref<32x32xbf16, #tpu.memory_space<vmem>>, %arg10: memref<1x32xf32, #tpu.memory_space<vmem>>, %arg11: memref<32x32xbf16, #tpu.memory_space<vmem>>, %arg12: memref<1x32xf32, #tpu.memory_space<vmem>>, %arg13: memref<2x32xf32, #tpu.memory_space<vmem>>) attributes {dimension_semantics = [#tpu.dimension_semantics<parallel>], iteration_bounds = array<i64: 1>, scalar_prefetch = 0 : i64, scratch_operands = 0 : i64, tpu.core_type = #tpu.core_type<tc>, window_params = [{transform_indices = @transform_0, window_bounds = array<i64: 2, 16, 4>}, {pipeline_mode = #tpu.pipeline_mode<synchronous>, transform_indices = @transform_1, window_bounds = array<i64: 12, 8>}, {pipeline_mode = #tpu.pipeline_mode<synchronous>, transform_indices = @transform_2, window_bounds = array<i64: 1, 8>}, {pipeline_mode = #tpu.pipeline_mode<synchronous>, transform_indices = @transform_3, window_bounds = array<i64: 40, 16>}, {pipeline_mode = #tpu.pipeline_mode<synchronous>, transform_indices = @transform_4, window_bounds = array<i64: 1, 16>}, {pipeline_mode = #tpu.pipeline_mode<synchronous>, transform_indices = @transform_5, window_bounds = array<i64: 112, 32>}, {pipeline_mode = #tpu.pipeline_mode<synchronous>, transform_indices = @transform_6, window_bounds = array<i64: 1, 32>}, {pipeline_mode = #tpu.pipeline_mode<synchronous>, transform_indices = @transform_7, window_bounds = array<i64: 32, 32>}, {pipeline_mode = #tpu.pipeline_mode<synchronous>, transform_indices = @transform_8, window_bounds = array<i64: 32, 32>}, {pipeline_mode = #tpu.pipeline_mode<synchronous>, transform_indices = @transform_9, window_bounds = array<i64: 1, 32>}, {pipeline_mode = #tpu.pipeline_mode<synchronous>, transform_indices = @transform_10, window_bounds = array<i64: 32, 32>}, {pipeline_mode = #tpu.pipeline_mode<synchronous>, transform_indices = @transform_11, window_bounds = array<i64: 1, 32>}, {transform_indices = @transform_12, window_bounds = array<i64: 2, 32>}]} {
    %c0 = arith.constant 0 : index
    %c0_0 = arith.constant 0 : index
    %c0_1 = arith.constant 0 : index
    %0 = vector.load %arg1[%c0, %c0_0, %c0_1] : memref<2x16x4xf32, #tpu.memory_space<vmem>>, vector<2x16x4xf32>
    %1 = arith.truncf %0 : vector<2x16x4xf32> to vector<2x16x4xbf16>
    %cst = arith.constant 0.000000e+00 : bf16
    %2 = vector.broadcast %cst : bf16 to vector<2x1x4xbf16>
    %3 = tpu.concatenate %2, %1, %2 in 1 : vector<2x1x4xbf16>, vector<2x16x4xbf16>, vector<2x1x4xbf16> -> vector<2x18x4xbf16>
    %4 = vector.extract_strided_slice %3 {offsets = [0, 0, 0], sizes = [2, 16, 4], strides = [1, 1, 1]} : vector<2x18x4xbf16> to vector<2x16x4xbf16>
    %5 = vector.extract_strided_slice %3 {offsets = [0, 1, 0], sizes = [2, 16, 4], strides = [1, 1, 1]} : vector<2x18x4xbf16> to vector<2x16x4xbf16>
    %6 = vector.extract_strided_slice %3 {offsets = [0, 2, 0], sizes = [2, 16, 4], strides = [1, 1, 1]} : vector<2x18x4xbf16> to vector<2x16x4xbf16>
    %7 = tpu.concatenate %4, %5, %6 in 2 : vector<2x16x4xbf16>, vector<2x16x4xbf16>, vector<2x16x4xbf16> -> vector<2x16x12xbf16>
    %8 = vector.shape_cast %7 : vector<2x16x12xbf16> to vector<32x12xbf16>
    %c0_2 = arith.constant 0 : index
    %c0_3 = arith.constant 0 : index
    %9 = vector.load %arg2[%c0_2, %c0_3] : memref<12x8xbf16, #tpu.memory_space<vmem>>, vector<12x8xbf16>
    %cst_4 = arith.constant dense<0.000000e+00> : vector<32x8xf32>
    %10 = tpu.matmul %8, %9, %cst_4 {dimension_numbers = #tpu.dot_dimension_numbers<[1], [0], [0], [1], [0, 0, 1, 1], [], []>} : vector<32x12xbf16>, vector<12x8xbf16>, vector<32x8xf32> -> vector<32x8xf32>
    %c0_5 = arith.constant 0 : index
    %c0_6 = arith.constant 0 : index
    %11 = vector.load %arg3[%c0_5, %c0_6] : memref<1x8xf32, #tpu.memory_space<vmem>>, vector<1x8xf32>
    %12 = vector.broadcast %11 : vector<1x8xf32> to vector<32x8xf32>
    %13 = arith.addf %10, %12 : vector<32x8xf32>
    %cst_7 = arith.constant 5.000000e-01 : f32
    %14 = vector.broadcast %cst_7 : f32 to vector<32x8xf32>
    %15 = arith.mulf %14, %13 : vector<32x8xf32>
    %cst_8 = arith.constant 0.707106769 : f32
    %16 = vector.broadcast %cst_8 : f32 to vector<32x8xf32>
    %17 = arith.mulf %13, %16 : vector<32x8xf32>
    %18 = math.erf %17 : vector<32x8xf32>
    %cst_9 = arith.constant 1.000000e+00 : f32
    %19 = vector.broadcast %cst_9 : f32 to vector<32x8xf32>
    %20 = arith.addf %19, %18 : vector<32x8xf32>
    %21 = arith.mulf %15, %20 : vector<32x8xf32>
    %22 = vector.shape_cast %21 : vector<32x8xf32> to vector<2x16x8xf32>
    %23 = arith.truncf %22 : vector<2x16x8xf32> to vector<2x16x8xbf16>
    %cst_10 = arith.constant 0.000000e+00 : bf16
    %24 = vector.broadcast %cst_10 : bf16 to vector<2x2x8xbf16>
    %25 = tpu.concatenate %24, %23, %24 in 1 : vector<2x2x8xbf16>, vector<2x16x8xbf16>, vector<2x2x8xbf16> -> vector<2x20x8xbf16>
    %26 = vector.extract_strided_slice %25 {offsets = [0, 0, 0], sizes = [2, 16, 8], strides = [1, 1, 1]} : vector<2x20x8xbf16> to vector<2x16x8xbf16>
    %27 = vector.extract_strided_slice %25 {offsets = [0, 1, 0], sizes = [2, 16, 8], strides = [1, 1, 1]} : vector<2x20x8xbf16> to vector<2x16x8xbf16>
    %28 = vector.extract_strided_slice %25 {offsets = [0, 2, 0], sizes = [2, 16, 8], strides = [1, 1, 1]} : vector<2x20x8xbf16> to vector<2x16x8xbf16>
    %29 = vector.extract_strided_slice %25 {offsets = [0, 3, 0], sizes = [2, 16, 8], strides = [1, 1, 1]} : vector<2x20x8xbf16> to vector<2x16x8xbf16>
    %30 = vector.extract_strided_slice %25 {offsets = [0, 4, 0], sizes = [2, 16, 8], strides = [1, 1, 1]} : vector<2x20x8xbf16> to vector<2x16x8xbf16>
    %31 = tpu.concatenate %26, %27, %28, %29, %30 in 2 : vector<2x16x8xbf16>, vector<2x16x8xbf16>, vector<2x16x8xbf16>, vector<2x16x8xbf16>, vector<2x16x8xbf16> -> vector<2x16x40xbf16>
    %32 = vector.shape_cast %31 : vector<2x16x40xbf16> to vector<32x40xbf16>
    %c0_11 = arith.constant 0 : index
    %c0_12 = arith.constant 0 : index
    %33 = vector.load %arg4[%c0_11, %c0_12] : memref<40x16xbf16, #tpu.memory_space<vmem>>, vector<40x16xbf16>
    %cst_13 = arith.constant dense<0.000000e+00> : vector<32x16xf32>
    %34 = tpu.matmul %32, %33, %cst_13 {dimension_numbers = #tpu.dot_dimension_numbers<[1], [0], [0], [1], [0, 0, 1, 1], [], []>} : vector<32x40xbf16>, vector<40x16xbf16>, vector<32x16xf32> -> vector<32x16xf32>
    %c0_14 = arith.constant 0 : index
    %c0_15 = arith.constant 0 : index
    %35 = vector.load %arg5[%c0_14, %c0_15] : memref<1x16xf32, #tpu.memory_space<vmem>>, vector<1x16xf32>
    %36 = vector.broadcast %35 : vector<1x16xf32> to vector<32x16xf32>
    %37 = arith.addf %34, %36 : vector<32x16xf32>
    %cst_16 = arith.constant 5.000000e-01 : f32
    %38 = vector.broadcast %cst_16 : f32 to vector<32x16xf32>
    %39 = arith.mulf %38, %37 : vector<32x16xf32>
    %cst_17 = arith.constant 0.707106769 : f32
    %40 = vector.broadcast %cst_17 : f32 to vector<32x16xf32>
    %41 = arith.mulf %37, %40 : vector<32x16xf32>
    %42 = math.erf %41 : vector<32x16xf32>
    %cst_18 = arith.constant 1.000000e+00 : f32
    %43 = vector.broadcast %cst_18 : f32 to vector<32x16xf32>
    %44 = arith.addf %43, %42 : vector<32x16xf32>
    %45 = arith.mulf %39, %44 : vector<32x16xf32>
    %46 = vector.shape_cast %45 : vector<32x16xf32> to vector<2x16x16xf32>
    %47 = arith.truncf %46 : vector<2x16x16xf32> to vector<2x16x16xbf16>
    %cst_19 = arith.constant 0.000000e+00 : bf16
    %48 = vector.broadcast %cst_19 : bf16 to vector<2x3x16xbf16>
    %49 = tpu.concatenate %48, %47, %48 in 1 : vector<2x3x16xbf16>, vector<2x16x16xbf16>, vector<2x3x16xbf16> -> vector<2x22x16xbf16>
    %50 = vector.extract_strided_slice %49 {offsets = [0, 0, 0], sizes = [2, 16, 16], strides = [1, 1, 1]} : vector<2x22x16xbf16> to vector<2x16x16xbf16>
    %51 = vector.extract_strided_slice %49 {offsets = [0, 1, 0], sizes = [2, 16, 16], strides = [1, 1, 1]} : vector<2x22x16xbf16> to vector<2x16x16xbf16>
    %52 = vector.extract_strided_slice %49 {offsets = [0, 2, 0], sizes = [2, 16, 16], strides = [1, 1, 1]} : vector<2x22x16xbf16> to vector<2x16x16xbf16>
    %53 = vector.extract_strided_slice %49 {offsets = [0, 3, 0], sizes = [2, 16, 16], strides = [1, 1, 1]} : vector<2x22x16xbf16> to vector<2x16x16xbf16>
    %54 = vector.extract_strided_slice %49 {offsets = [0, 4, 0], sizes = [2, 16, 16], strides = [1, 1, 1]} : vector<2x22x16xbf16> to vector<2x16x16xbf16>
    %55 = vector.extract_strided_slice %49 {offsets = [0, 5, 0], sizes = [2, 16, 16], strides = [1, 1, 1]} : vector<2x22x16xbf16> to vector<2x16x16xbf16>
    %56 = vector.extract_strided_slice %49 {offsets = [0, 6, 0], sizes = [2, 16, 16], strides = [1, 1, 1]} : vector<2x22x16xbf16> to vector<2x16x16xbf16>
    %57 = tpu.concatenate %50, %51, %52, %53, %54, %55, %56 in 2 : vector<2x16x16xbf16>, vector<2x16x16xbf16>, vector<2x16x16xbf16>, vector<2x16x16xbf16>, vector<2x16x16xbf16>, vector<2x16x16xbf16>, vector<2x16x16xbf16> -> vector<2x16x112xbf16>
    %58 = vector.shape_cast %57 : vector<2x16x112xbf16> to vector<32x112xbf16>
    %c0_20 = arith.constant 0 : index
    %c0_21 = arith.constant 0 : index
    %59 = vector.load %arg6[%c0_20, %c0_21] : memref<112x32xbf16, #tpu.memory_space<vmem>>, vector<112x32xbf16>
    %cst_22 = arith.constant dense<0.000000e+00> : vector<32x32xf32>
    %60 = tpu.matmul %58, %59, %cst_22 {dimension_numbers = #tpu.dot_dimension_numbers<[1], [0], [0], [1], [0, 0, 1, 1], [], []>} : vector<32x112xbf16>, vector<112x32xbf16>, vector<32x32xf32> -> vector<32x32xf32>
    %c0_23 = arith.constant 0 : index
    %c0_24 = arith.constant 0 : index
    %61 = vector.load %arg7[%c0_23, %c0_24] : memref<1x32xf32, #tpu.memory_space<vmem>>, vector<1x32xf32>
    %62 = vector.broadcast %61 : vector<1x32xf32> to vector<32x32xf32>
    %63 = arith.addf %60, %62 : vector<32x32xf32>
    %cst_25 = arith.constant 5.000000e-01 : f32
    %64 = vector.broadcast %cst_25 : f32 to vector<32x32xf32>
    %65 = arith.mulf %64, %63 : vector<32x32xf32>
    %cst_26 = arith.constant 0.707106769 : f32
    %66 = vector.broadcast %cst_26 : f32 to vector<32x32xf32>
    %67 = arith.mulf %63, %66 : vector<32x32xf32>
    %68 = math.erf %67 : vector<32x32xf32>
    %cst_27 = arith.constant 1.000000e+00 : f32
    %69 = vector.broadcast %cst_27 : f32 to vector<32x32xf32>
    %70 = arith.addf %69, %68 : vector<32x32xf32>
    %71 = arith.mulf %65, %70 : vector<32x32xf32>
    %72 = vector.shape_cast %71 : vector<32x32xf32> to vector<2x16x32xf32>
    %cst_28 = arith.constant dense<0.000000e+00> : vector<2x32xf32>
    %73 = vector.multi_reduction <add>, %72, %cst_28 [1] : vector<2x16x32xf32> to vector<2x32xf32>
    %cst_29 = arith.constant 1.600000e+01 : f32
    %74 = vector.broadcast %cst_29 : f32 to vector<2x32xf32>
    %75 = arith.divf %73, %74 : vector<2x32xf32>
    %cst_30 = arith.constant dense<0xFF800000> : vector<2x32xf32>
    %76 = vector.multi_reduction <maximumf>, %72, %cst_30 [1] : vector<2x16x32xf32> to vector<2x32xf32>
    %77 = arith.truncf %75 : vector<2x32xf32> to vector<2x32xbf16>
    %c0_31 = arith.constant 0 : index
    %c0_32 = arith.constant 0 : index
    %78 = vector.load %arg8[%c0_31, %c0_32] : memref<32x32xbf16, #tpu.memory_space<vmem>>, vector<32x32xbf16>
    %cst_33 = arith.constant dense<0.000000e+00> : vector<2x32xf32>
    %79 = tpu.matmul %77, %78, %cst_33 {dimension_numbers = #tpu.dot_dimension_numbers<[1], [0], [0], [1], [0, 0, 1, 1], [], []>} : vector<2x32xbf16>, vector<32x32xbf16>, vector<2x32xf32> -> vector<2x32xf32>
    %80 = arith.truncf %76 : vector<2x32xf32> to vector<2x32xbf16>
    %c0_34 = arith.constant 0 : index
    %c0_35 = arith.constant 0 : index
    %81 = vector.load %arg9[%c0_34, %c0_35] : memref<32x32xbf16, #tpu.memory_space<vmem>>, vector<32x32xbf16>
    %cst_36 = arith.constant dense<0.000000e+00> : vector<2x32xf32>
    %82 = tpu.matmul %80, %81, %cst_36 {dimension_numbers = #tpu.dot_dimension_numbers<[1], [0], [0], [1], [0, 0, 1, 1], [], []>} : vector<2x32xbf16>, vector<32x32xbf16>, vector<2x32xf32> -> vector<2x32xf32>
    %83 = arith.addf %79, %82 : vector<2x32xf32>
    %c0_37 = arith.constant 0 : index
    %c0_38 = arith.constant 0 : index
    %84 = vector.load %arg10[%c0_37, %c0_38] : memref<1x32xf32, #tpu.memory_space<vmem>>, vector<1x32xf32>
    %85 = vector.broadcast %84 : vector<1x32xf32> to vector<2x32xf32>
    %86 = arith.addf %83, %85 : vector<2x32xf32>
    %cst_39 = arith.constant 0.000000e+00 : f32
    %87 = vector.broadcast %cst_39 : f32 to vector<2x32xf32>
    %88 = arith.maximumf %86, %87 : vector<2x32xf32>
    %89 = arith.truncf %88 : vector<2x32xf32> to vector<2x32xbf16>
    %c0_40 = arith.constant 0 : index
    %c0_41 = arith.constant 0 : index
    %90 = vector.load %arg11[%c0_40, %c0_41] : memref<32x32xbf16, #tpu.memory_space<vmem>>, vector<32x32xbf16>
    %cst_42 = arith.constant dense<0.000000e+00> : vector<2x32xf32>
    %91 = tpu.matmul %89, %90, %cst_42 {dimension_numbers = #tpu.dot_dimension_numbers<[1], [0], [0], [1], [0, 0, 1, 1], [], []>} : vector<2x32xbf16>, vector<32x32xbf16>, vector<2x32xf32> -> vector<2x32xf32>
    %c0_43 = arith.constant 0 : index
    %c0_44 = arith.constant 0 : index
    %92 = vector.load %arg12[%c0_43, %c0_44] : memref<1x32xf32, #tpu.memory_space<vmem>>, vector<1x32xf32>
    %93 = vector.broadcast %92 : vector<1x32xf32> to vector<2x32xf32>
    %94 = arith.addf %91, %93 : vector<2x32xf32>
    %c0_45 = arith.constant 0 : index
    %c0_46 = arith.constant 0 : index
    %95 = vector.load %arg13[%c0_45, %c0_46] : memref<2x32xf32, #tpu.memory_space<vmem>>, vector<2x32xf32>
    tpu.vector_store %arg13[%c0_45, %c0_46], %94 {strides = array<i32>} : memref<2x32xf32, #tpu.memory_space<vmem>>, vector<2x32xf32>,
    return
  }
  func.func @transform_0(%arg0: i32) -> (i32, i32, i32) {
    %c0_i32 = arith.constant 0 : i32
    %c0_i32_0 = arith.constant 0 : i32
    %c0_i32_1 = arith.constant 0 : i32
    return %arg0, %c0_i32, %c0_i32_0 : i32, i32, i32
  }
  func.func @transform_1(%arg0: i32) -> (i32, i32) {
    %c0_i32 = arith.constant 0 : i32
    %c0_i32_0 = arith.constant 0 : i32
    %c0_i32_1 = arith.constant 0 : i32
    return %c0_i32, %c0_i32_0 : i32, i32
  }
  func.func @transform_2(%arg0: i32) -> (i32, i32) {
    %c0_i32 = arith.constant 0 : i32
    %c0_i32_0 = arith.constant 0 : i32
    %c0_i32_1 = arith.constant 0 : i32
    return %c0_i32, %c0_i32_0 : i32, i32
  }
  func.func @transform_3(%arg0: i32) -> (i32, i32) {
    %c0_i32 = arith.constant 0 : i32
    %c0_i32_0 = arith.constant 0 : i32
    %c0_i32_1 = arith.constant 0 : i32
    return %c0_i32, %c0_i32_0 : i32, i32
  }
  func.func @transform_4(%arg0: i32) -> (i32, i32) {
    %c0_i32 = arith.constant 0 : i32
    %c0_i32_0 = arith.constant 0 : i32
    %c0_i32_1 = arith.constant 0 : i32
    return %c0_i32, %c0_i32_0 : i32, i32
  }
  func.func @transform_5(%arg0: i32) -> (i32, i32) {
    %c0_i32 = arith.constant 0 : i32
    %c0_i32_0 = arith.constant 0 : i32
    %c0_i32_1 = arith.constant 0 : i32
    return %c0_i32, %c0_i32_0 : i32, i32
  }
  func.func @transform_6(%arg0: i32) -> (i32, i32) {
    %c0_i32 = arith.constant 0 : i32
    %c0_i32_0 = arith.constant 0 : i32
    %c0_i32_1 = arith.constant 0 : i32
    return %c0_i32, %c0_i32_0 : i32, i32
  }
  func.func @transform_7(%arg0: i32) -> (i32, i32) {
    %c0_i32 = arith.constant 0 : i32
    %c0_i32_0 = arith.constant 0 : i32
    %c0_i32_1 = arith.constant 0 : i32
    return %c0_i32, %c0_i32_0 : i32, i32
  }
  func.func @transform_8(%arg0: i32) -> (i32, i32) {
    %c0_i32 = arith.constant 0 : i32
    %c0_i32_0 = arith.constant 0 : i32
    %c0_i32_1 = arith.constant 0 : i32
    return %c0_i32, %c0_i32_0 : i32, i32
  }
  func.func @transform_9(%arg0: i32) -> (i32, i32) {
    %c0_i32 = arith.constant 0 : i32
    %c0_i32_0 = arith.constant 0 : i32
    %c0_i32_1 = arith.constant 0 : i32
    return %c0_i32, %c0_i32_0 : i32, i32
  }
  func.func @transform_10(%arg0: i32) -> (i32, i32) {
    %c0_i32 = arith.constant 0 : i32
    %c0_i32_0 = arith.constant 0 : i32
    %c0_i32_1 = arith.constant 0 : i32
    return %c0_i32, %c0_i32_0 : i32, i32
  }
  func.func @transform_11(%arg0: i32) -> (i32, i32) {
    %c0_i32 = arith.constant 0 : i32
    %c0_i32_0 = arith.constant 0 : i32
    %c0_i32_1 = arith.constant 0 : i32
    return %c0_i32, %c0_i32_0 : i32, i32
  }
  func.func @transform_12(%arg0: i32) -> (i32, i32) {
    %c0_i32 = arith.constant 0 : i32
    %c0_i32_0 = arith.constant 0 : i32
    return %arg0, %c0_i32 : i32, i32
  }
}

</mosaic_0001>

<llo_original>
// kernel: tpu_custom_call.1
$region0: #{tpu_custom_call.1}
  #allocation0 [shape = 'u32[]', space=smem, size = 0x4, offset = 0x4, fixed_abs, tag = 'smem constant byte address 0x4 - core index']
  #allocation1 [shape = 'u32[144,128]{1,0:T(1,128)}', space=vmem, size = 0x12000, scoped, tag = 'internal scratch']
  %s0 = inlined_call_operand.vmem [shape: f32[2,16,4], index: 0, kind: input, shape index: {}]
  %s1 = inlined_call_operand.vmem [shape: bf16[12,8], index: 1, kind: input, shape index: {}]
  %s2 = inlined_call_operand.vmem [shape: f32[1,8], index: 2, kind: input, shape index: {}]
  %s3 = inlined_call_operand.vmem [shape: bf16[40,16], index: 3, kind: input, shape index: {}]
  %s4 = inlined_call_operand.vmem [shape: f32[1,16], index: 4, kind: input, shape index: {}]
  %s5 = inlined_call_operand.vmem [shape: bf16[112,32], index: 5, kind: input, shape index: {}]
  %s6 = inlined_call_operand.vmem [shape: f32[1,32], index: 6, kind: input, shape index: {}]
  %s7 = inlined_call_operand.vmem [shape: bf16[32,32], index: 7, kind: input, shape index: {}]
  %s8 = inlined_call_operand.vmem [shape: bf16[32,32], index: 8, kind: input, shape index: {}]
  %s9 = inlined_call_operand.vmem [shape: f32[1,32], index: 9, kind: input, shape index: {}]
  %s10 = inlined_call_operand.vmem [shape: bf16[32,32], index: 10, kind: input, shape index: {}]
  %s11 = inlined_call_operand.vmem [shape: f32[1,32], index: 11, kind: input, shape index: {}]
  %s12 = inlined_call_operand.hbm [shape: f32[2,32], index: 12, kind: output, shape index: {}]
  %s13 = sld [smem:[#allocation0]]
  $region58: #{tpu_custom_call.1} parent=0
    _
  %s15 = ssub.s32 1, %s13
  %s16 = scalar_select 0, %s15, %s13
  $region1: #{tpu_custom_call.1} parent=0
    #allocation2 [shape = 'u8[1024]{0}', space=vmem, size = 0x400, scoped, tag = 'output window, operand 0, single buffered']
    #allocation3 [shape = 's32[1]{0}', space=sflag, size = 0x4, scoped, tag = 'scoped memory for tpu_custom_call.1']
    %17 = vsyncpa [#allocation3], 0
    // Predicated region
    $region2: #{tpu_custom_call.1} parent=1 // pred_check
      _
    $region3: #{tpu_custom_call.1} parent=1 // pred_check_branch
      %19 = sbr.rel (0) target = $region5
    $region4: #{tpu_custom_call.1} parent=1 // pred_region
      _
    $region5: #{tpu_custom_call.1} parent=1 // pred_fallthru
      _
    // Predicated region
    $region6: #{tpu_custom_call.1} parent=1 // pred_check
      _
    $region7: #{tpu_custom_call.1} parent=1 // pred_check_branch
      %21 = sbr.rel (0) target = $region9
    $region8: #{tpu_custom_call.1} parent=1 // pred_region
      _
    $region9: #{tpu_custom_call.1} parent=1 // pred_fallthru
      _
    // Predicated region
    $region10: #{tpu_custom_call.1} parent=1 // pred_check
      _
    $region11: #{tpu_custom_call.1} parent=1 // pred_check_branch
      %23 = sbr.rel (0) target = $region13
    $region12: #{tpu_custom_call.1} parent=1 // pred_region
      _
    $region13: #{tpu_custom_call.1} parent=1 // pred_fallthru
      _
    // Predicated region
    $region14: #{tpu_custom_call.1} parent=1 // pred_check
      _
    $region15: #{tpu_custom_call.1} parent=1 // pred_check_branch
      %25 = sbr.rel (0) target = $region17
    $region16: #{tpu_custom_call.1} parent=1 // pred_region
      _
    $region17: #{tpu_custom_call.1} parent=1 // pred_fallthru
      _
    // Predicated region
    $region18: #{tpu_custom_call.1} parent=1 // pred_check
      _
    $region19: #{tpu_custom_call.1} parent=1 // pred_check_branch
      %27 = sbr.rel (0) target = $region21
    $region20: #{tpu_custom_call.1} parent=1 // pred_region
      _
    $region21: #{tpu_custom_call.1} parent=1 // pred_fallthru
      _
    // Predicated region
    $region22: #{tpu_custom_call.1} parent=1 // pred_check
      _
    $region23: #{tpu_custom_call.1} parent=1 // pred_check_branch
      %29 = sbr.rel (0) target = $region25
    $region24: #{tpu_custom_call.1} parent=1 // pred_region
      _
    $region25: #{tpu_custom_call.1} parent=1 // pred_fallthru
      _
    // Predicated region
    $region26: #{tpu_custom_call.1} parent=1 // pred_check
      _
    $region27: #{tpu_custom_call.1} parent=1 // pred_check_branch
      %31 = sbr.rel (0) target = $region29
    $region28: #{tpu_custom_call.1} parent=1 // pred_region
      _
    $region29: #{tpu_custom_call.1} parent=1 // pred_fallthru
      _
    // Predicated region
    $region30: #{tpu_custom_call.1} parent=1 // pred_check
      _
    $region31: #{tpu_custom_call.1} parent=1 // pred_check_branch
      %33 = sbr.rel (0) target = $region33
    $region32: #{tpu_custom_call.1} parent=1 // pred_region
      _
    $region33: #{tpu_custom_call.1} parent=1 // pred_fallthru
      _
    // Predicated region
    $region34: #{tpu_custom_call.1} parent=1 // pred_check
      _
    $region35: #{tpu_custom_call.1} parent=1 // pred_check_branch
      %35 = sbr.rel (0) target = $region37
    $region36: #{tpu_custom_call.1} parent=1 // pred_region
      _
    $region37: #{tpu_custom_call.1} parent=1 // pred_fallthru
      _
    // Predicated region
    $region38: #{tpu_custom_call.1} parent=1 // pred_check
      _
    $region39: #{tpu_custom_call.1} parent=1 // pred_check_branch
      %37 = sbr.rel (0) target = $region41
    $region40: #{tpu_custom_call.1} parent=1 // pred_region
      _
    $region41: #{tpu_custom_call.1} parent=1 // pred_fallthru
      _
    // Predicated region
    $region42: #{tpu_custom_call.1} parent=1 // pred_check
      _
    $region43: #{tpu_custom_call.1} parent=1 // pred_check_branch
      %39 = sbr.rel (0) target = $region45
    $region44: #{tpu_custom_call.1} parent=1 // pred_region
      _
    $region45: #{tpu_custom_call.1} parent=1 // pred_fallthru
      _
    // Predicated region
    $region46: #{tpu_custom_call.1} parent=1 // pred_check
      _
    $region47: #{tpu_custom_call.1} parent=1 // pred_check_branch
      %41 = sbr.rel (0) target = $region49
    $region48: #{tpu_custom_call.1} parent=1 // pred_region
      _
    $region49: #{tpu_custom_call.1} parent=1 // pred_fallthru
      _
    %v43 = vld [vmem:[%s0] sm:$0xff]
    %v44 = vld [vmem:[%s0 + $0x8] sm:$0xff]
    %v45 = vld [vmem:[%s0 + $0x10] sm:$0xff]
    %v46 = vld [vmem:[%s0 + $0x18] sm:$0xff]
    %v47 = vpack.c.bf16 %v44, %v43
    %v48 = vpack.c.bf16 %v46, %v45
    %v50 = vshrl.u32 %v47, 16
    %v52 = vrot.slane %v50, 7
    %v53 = vshll.u32 %v47, 16
    %v55 = vor.u32 %v52, %v53
    %v57 = vshrl.u32 %v48, 16
    %v59 = vrot.slane %v57, 7
    %v60 = vshll.u32 %v48, 16
    %v62 = vor.u32 %v59, %v60
    %vm67 = vcmask 1040384
    %vm68 = vsmask.f32 256
    %vm69 = vmand %vm67, %vm68
    %v70 = vsel %vm69, 0, %v55
    %v71 = vsel %vm69, 0, %v62
    %v72 = vsel %vm69, %v52, 0
    %v73 = vsel %vm69, %v59, 0
    %vm74 = vsmask.f32 7424
    %v76 = vshrl.u32 %v70, 16
    %v78 = vshll.u32 %v70, 16
    %v80 = vrot.slane %v78, 1
    %v81 = vor.u32 %v76, %v80
    %v83 = vshll.u32 %v72, 16
    %v85 = vrot.slane %v83, 1
    %v86 = vsel %vm74, %v81, %v85
    %v88 = vshrl.u32 %v71, 16
    %v90 = vshll.u32 %v71, 16
    %v92 = vrot.slane %v90, 1
    %v93 = vor.u32 %v88, %v92
    %v95 = vshll.u32 %v73, 16
    %v97 = vrot.slane %v95, 1
    %v98 = vsel %vm74, %v93, %v97
    %99 = vrot.lane.b32.xlu0 %v86, 4
    %v100 = vpop.permute.xlu0 %99
    %101 = vrot.lane.b32.xlu0 %v98, 4
    %v102 = vpop.permute.xlu0 %101
    %vm107 = vcmask 1046528
    %v108 = vrot.slane %v70, 1
    %v109 = vrot.slane %v72, 1
    %v110 = vsel %vm107, %v108, %v109
    %v111 = vrot.slane %v71, 1
    %v112 = vrot.slane %v73, 1
    %v113 = vsel %vm107, %v111, %v112
    %114 = vrot.lane.b32.xlu0 %v110, 8
    %v115 = vpop.permute.xlu0 %114
    %116 = vrot.lane.b32.xlu0 %v113, 8
    %v117 = vpop.permute.xlu0 %116
    %vm118 = vcmask 31744
    %v120 = vsel %vm118, %v70, %v100
    %v122 = vsel %vm118, %v71, %v102
    %vm123 = vcmask 64512
    %v125 = vsel %vm123, %v120, %v115
    %v127 = vsel %vm123, %v122, %v117
    %v128 = vld [vmem:[%s1] sm:$0xf]
    %v129 = vld [vmem:[%s1 + $0x4] sm:$0x3]
    %v130 = vld [vmem:[%s2] sm:$0x1]
    %v132 = vlaneseq
    %v133 = vshrl.u32 %v132, 7
    %v134 = vsub.s32 0, %v133
    %v135 = vrot.slane %v130, %v134
    %v139 = vunpack.c.l.b16 %v128
    %v140 = vunpack.c.l.b16 %v129
    %v141 = vpack.c.b16 %v140, %v139
    %vm142 = vcmask 97280
    %v143 = vsel %vm142, %v125, 0
    %v145 = vsel %vm142, %v127, 0
    %vm147 = vcmask 1045504
    %v149 = vsel %vm147, %v141, 0
    %151 = vmatprep.subr.bf16.mxu0 0
    %152 = vmatpush1.bf16.msra.mxu0 0
    %153 = vmatprep.subr.bf16.mxu0 0
    %154 = vmatpush1.bf16.msra.mxu0 0
    %155 = vmatprep.subr.bf16.mxu0 0
    %156 = vmatpush1.bf16.msra.mxu0 0
    %157 = vmatprep.subr.bf16.mxu0 0
    %158 = vmatpush1.bf16.msra.mxu0 0
    %159 = vmatprep.subr.bf16.mxu0 0
    %160 = vmatpush1.bf16.msra.mxu0 0
    %161 = vmatprep.subr.bf16.mxu0 0
    %162 = vmatpush1.bf16.msra.mxu0 0
    %163 = vmatprep.subr.bf16.mxu0 0
    %164 = vmatpush1.bf16.msra.mxu0 0
    %165 = vmatprep.subr.bf16.mxu0 0
    %166 = vmatpush1.bf16.msra.mxu0 %v149
    %167 = vmatprep.subr.bf16.mxu0 0
    %168 = vmatpush2.bf16.msra.mxu0 0
    %169 = vmatprep.subr.bf16.mxu0 0
    %170 = vmatpush2.bf16.msra.mxu0 0
    %171 = vmatprep.subr.bf16.mxu0 0
    %172 = vmatpush2.bf16.msra.mxu0 0
    %173 = vmatprep.subr.bf16.mxu0 0
    %174 = vmatpush2.bf16.msra.mxu0 0
    %175 = vmatprep.subr.bf16.mxu0 0
    %176 = vmatpush2.bf16.msra.mxu0 0
    %177 = vmatprep.subr.bf16.mxu0 0
    %178 = vmatpush2.bf16.msra.mxu0 0
    %179 = vmatprep.subr.bf16.mxu0 0
    %180 = vmatpush2.bf16.msra.mxu0 0
    %181 = vmatprep.subr.bf16.mxu0 0
    %182 = vmatpush2.bf16.msra.mxu0 0
    %183 = vmatprep.mubr.bf16.mxu0 0
    %184 = vmatmul.mubr.bf16.gmra.mxu0 %v143
    %v185 = vpop.f32.mrf.mxu0
    %v186 = vadd.f32 %v135, %v185
    %v187 = vpop.f32.mrf.mxu0
    %v188 = vpop.f32.mrf.mxu0
    %v189 = vadd.f32 %v135, %v188
    %v190 = vpop.f32.mrf.mxu0
    %191 = vmatprep.mubr.bf16.mxu0 0
    %192 = vmatmul.mubr.bf16.gmra.mxu0 %v145
    %v193 = vpop.f32.mrf.mxu0
    %v194 = vadd.f32 %v135, %v193
    %v195 = vpop.f32.mrf.mxu0
    %v196 = vpop.f32.mrf.mxu0
    %v197 = vadd.f32 %v135, %v196
    %v198 = vpop.f32.mrf.mxu0
    %199 = vdwg.mxu0
    %v200 = vmul.f32 %v186, 0.5
    %v201 = vmul.f32 %v189, 0.5
    %v202 = vmul.f32 %v194, 0.5
    %v203 = vmul.f32 %v197, 0.5
    %v204 = vmul.f32 %v186, 0.70710677
    %v205 = vmul.f32 %v189, 0.70710677
    %v206 = vmul.f32 %v194, 0.70710677
    %v207 = vmul.f32 %v197, 0.70710677
    %v208 = verf.f32.pop %v204
    %v209 = verf.f32.pop %v205
    %v210 = verf.f32.pop %v206
    %v211 = verf.f32.pop %v207
    %v212 = vadd.f32 %v208, 1.0
    %v213 = vadd.f32 %v209, 1.0
    %v214 = vadd.f32 %v210, 1.0
    %v215 = vadd.f32 %v211, 1.0
    %v216 = vmul.f32 %v200, %v212
    %v217 = vmul.f32 %v201, %v213
    %v218 = vmul.f32 %v202, %v214
    %v219 = vmul.f32 %v203, %v215
    %v220 = vpack.c.bf16 %v217, %v216
    %v221 = vpack.c.bf16 %v219, %v218
    %v224 = vrot.slane %v220, 7
    %v225 = vrot.slane %v221, 7
    %vm226 = vcmask 1040384
    %v229 = vsel %vm226, 0, %v224
    %v231 = vsel %vm226, 0, %v225
    %v232 = vsel %vm226, %v224, 0
    %v233 = vsel %vm226, %v225, 0
    %v234 = vshrl.u32 %v229, 16
    %v236 = vshll.u32 %v229, 16
    %v238 = vrot.slane %v236, 1
    %v239 = vor.u32 %v234, %v238
    %v240 = vshll.u32 %v232, 16
    %v242 = vrot.slane %v240, 1
    %v243 = vsel %vm74, %v239, %v242
    %v244 = vshrl.u32 %v231, 16
    %v246 = vshll.u32 %v231, 16
    %v248 = vrot.slane %v246, 1
    %v249 = vor.u32 %v244, %v248
    %v250 = vshll.u32 %v233, 16
    %v252 = vrot.slane %v250, 1
    %v253 = vsel %vm74, %v249, %v252
    %254 = vrot.lane.b32.xlu0 %v243, 8
    %v255 = vpop.permute.xlu0 %254
    %256 = vrot.lane.b32.xlu0 %v253, 8
    %v257 = vpop.permute.xlu0 %256
    %v262 = vrot.slane %v229, 1
    %v263 = vrot.slane %v232, 1
    %v264 = vsel %vm107, %v262, %v263
    %v265 = vrot.slane %v231, 1
    %v266 = vrot.slane %v233, 1
    %v267 = vsel %vm107, %v265, %v266
    %268 = vrot.lane.b32.xlu0 %v264, 16
    %v269 = vpop.permute.xlu0 %268
    %270 = vrot.lane.b32.xlu0 %v267, 16
    %v271 = vpop.permute.xlu0 %270
    %vm272 = vsmask.f32 6400
    %v273 = vrot.slane %v234, 1
    %v274 = vrot.slane %v236, 2
    %v275 = vor.u32 %v273, %v274
    %v276 = vshrl.u32 %v232, 16
    %v278 = vrot.slane %v276, 1
    %v279 = vrot.slane %v240, 2
    %v280 = vor.u32 %v278, %v279
    %v281 = vsel %vm272, %v275, %v280
    %v282 = vrot.slane %v244, 1
    %v283 = vrot.slane %v246, 2
    %v284 = vor.u32 %v282, %v283
    %v285 = vshrl.u32 %v233, 16
    %v287 = vrot.slane %v285, 1
    %v288 = vrot.slane %v250, 2
    %v289 = vor.u32 %v287, %v288
    %v290 = vsel %vm272, %v284, %v289
    %291 = vrot.lane.b32.xlu0 %v281, 24
    %v292 = vpop.permute.xlu0 %291
    %293 = vrot.lane.b32.xlu0 %v290, 24
    %v294 = vpop.permute.xlu0 %293
    %vm295 = vcmask 1045504
    %v296 = vrot.slane %v229, 2
    %v297 = vrot.slane %v232, 2
    %v298 = vsel %vm295, %v296, %v297
    %v299 = vrot.slane %v231, 2
    %v300 = vrot.slane %v233, 2
    %v301 = vsel %vm295, %v299, %v300
    %302 = vrot.lane.b32.xlu0 %v298, 32
    %v303 = vpop.permute.xlu0 %302
    %304 = vrot.lane.b32.xlu0 %v301, 32
    %v305 = vpop.permute.xlu0 %304
    %v307 = vsel %vm123, %v229, %v255
    %v309 = vsel %vm123, %v231, %v257
    %vm310 = vcmask 130048
    %v312 = vsel %vm310, %v307, %v269
    %v314 = vsel %vm310, %v309, %v271
    %vm315 = vcmask 195584
    %v317 = vsel %vm315, %v312, %v292
    %v319 = vsel %vm315, %v314, %v294
    %vm320 = vcmask 261120
    %v322 = vsel %vm320, %v317, %v303
    %v324 = vsel %vm320, %v319, %v305
    %v325 = vld [vmem:[%s3] sm:$0xf]
    %v326 = vld [vmem:[%s3 + $0x4] sm:$0xf]
    %v327 = vld [vmem:[%s3 + $0x8] sm:$0xf]
    %v328 = vld [vmem:[%s3 + $0xc] sm:$0xf]
    %v329 = vld [vmem:[%s3 + $0x10] sm:$0xf]
    %v330 = vld [vmem:[%s4] sm:$0x1]
    %v332 = vlaneseq
    %v333 = vshrl.u32 %v332, 7
    %v334 = vsub.s32 0, %v333
    %v335 = vrot.slane %v330, %v334
    %v342 = vunpack.c.l.b16 %v325
    %v343 = vunpack.c.l.b16 %v326
    %v344 = vunpack.c.l.b16 %v327
    %v345 = vunpack.c.l.b16 %v328
    %v346 = vunpack.c.l.b16 %v329
    %v347 = vpack.c.b16 %v343, %v342
    %v348 = vpack.c.b16 %v345, %v344
    %v349 = vpack.c.b16 %v346, %v346
    %vm352 = vcmask 326656
    %v353 = vsel %vm352, %v322, 0
    %v355 = vsel %vm352, %v324, 0
    %vm357 = vcmask 1043456
    %v359 = vsel %vm357, %v349, 0
    %361 = vmatprep.subr.bf16.mxu0 0
    %362 = vmatpush1.bf16.msra.mxu0 0
    %363 = vmatprep.subr.bf16.mxu0 0
    %364 = vmatpush1.bf16.msra.mxu0 0
    %365 = vmatprep.subr.bf16.mxu0 0
    %366 = vmatpush1.bf16.msra.mxu0 0
    %367 = vmatprep.subr.bf16.mxu0 0
    %368 = vmatpush1.bf16.msra.mxu0 0
    %369 = vmatprep.subr.bf16.mxu0 0
    %370 = vmatpush1.bf16.msra.mxu0 0
    %371 = vmatprep.subr.bf16.mxu0 0
    %372 = vmatpush1.bf16.msra.mxu0 %v359
    %373 = vmatprep.subr.bf16.mxu0 0
    %374 = vmatpush1.bf16.msra.mxu0 %v348
    %375 = vmatprep.subr.bf16.mxu0 0
    %376 = vmatpush1.bf16.msra.mxu0 %v347
    %377 = vmatprep.subr.bf16.mxu0 0
    %378 = vmatpush2.bf16.msra.mxu0 0
    %379 = vmatprep.subr.bf16.mxu0 0
    %380 = vmatpush2.bf16.msra.mxu0 0
    %381 = vmatprep.subr.bf16.mxu0 0
    %382 = vmatpush2.bf16.msra.mxu0 0
    %383 = vmatprep.subr.bf16.mxu0 0
    %384 = vmatpush2.bf16.msra.mxu0 0
    %385 = vmatprep.subr.bf16.mxu0 0
    %386 = vmatpush2.bf16.msra.mxu0 0
    %387 = vmatprep.subr.bf16.mxu0 0
    %388 = vmatpush2.bf16.msra.mxu0 0
    %389 = vmatprep.subr.bf16.mxu0 0
    %390 = vmatpush2.bf16.msra.mxu0 0
    %391 = vmatprep.subr.bf16.mxu0 0
    %392 = vmatpush2.bf16.msra.mxu0 0
    %393 = vmatprep.mubr.bf16.mxu0 0
    %394 = vmatmul.mubr.bf16.gmra.mxu0 %v353
    %v395 = vpop.f32.mrf.mxu0
    %v396 = vadd.f32 %v335, %v395
    %v397 = vpop.f32.mrf.mxu0
    %v398 = vpop.f32.mrf.mxu0
    %v399 = vadd.f32 %v335, %v398
    %v400 = vpop.f32.mrf.mxu0
    %401 = vmatprep.mubr.bf16.mxu0 0
    %402 = vmatmul.mubr.bf16.gmra.mxu0 %v355
    %v403 = vpop.f32.mrf.mxu0
    %v404 = vadd.f32 %v335, %v403
    %v405 = vpop.f32.mrf.mxu0
    %v406 = vpop.f32.mrf.mxu0
    %v407 = vadd.f32 %v335, %v406
    %v408 = vpop.f32.mrf.mxu0
    %409 = vdwg.mxu0
    %v410 = vmul.f32 %v396, 0.5
    %v411 = vmul.f32 %v399, 0.5
    %v412 = vmul.f32 %v404, 0.5
    %v413 = vmul.f32 %v407, 0.5
    %v414 = vmul.f32 %v396, 0.70710677
    %v415 = vmul.f32 %v399, 0.70710677
    %v416 = vmul.f32 %v404, 0.70710677
    %v417 = vmul.f32 %v407, 0.70710677
    %v418 = verf.f32.pop %v414
    %v419 = verf.f32.pop %v415
    %v420 = verf.f32.pop %v416
    %v421 = verf.f32.pop %v417
    %v422 = vadd.f32 %v418, 1.0
    %v423 = vadd.f32 %v419, 1.0
    %v424 = vadd.f32 %v420, 1.0
    %v425 = vadd.f32 %v421, 1.0
    %v426 = vmul.f32 %v410, %v422
    %v427 = vmul.f32 %v411, %v423
    %v428 = vmul.f32 %v412, %v424
    %v429 = vmul.f32 %v413, %v425
    %v430 = vpack.c.bf16 %v427, %v426
    %v431 = vpack.c.bf16 %v429, %v428
    %v433 = vshrl.u32 %v430, 16
    %v435 = vrot.slane %v433, 6
    %v436 = vshll.u32 %v430, 16
    %v438 = vrot.slane %v436, 7
    %v439 = vor.u32 %v435, %v438
    %v441 = vshrl.u32 %v431, 16
    %v443 = vrot.slane %v441, 6
    %v444 = vshll.u32 %v431, 16
    %v446 = vrot.slane %v444, 7
    %v447 = vor.u32 %v443, %v446
    %vm450 = vcmask 1041408
    %vm451 = vsmask.f32 1280
    %vm452 = vmand %vm450, %vm451
    %v453 = vsel %vm452, 0, %v439
    %v454 = vsel %vm452, 0, %v447
    %v455 = vsel %vm452, %v439, 0
    %v456 = vsel %vm452, %v447, 0
    %v458 = vshrl.u32 %v453, 16
    %v460 = vshll.u32 %v453, 16
    %v462 = vrot.slane %v460, 1
    %v463 = vor.u32 %v458, %v462
    %v465 = vshll.u32 %v455, 16
    %v467 = vrot.slane %v465, 1
    %v468 = vsel %vm74, %v463, %v467
    %v470 = vshrl.u32 %v454, 16
    %v472 = vshll.u32 %v454, 16
    %v474 = vrot.slane %v472, 1
    %v475 = vor.u32 %v470, %v474
    %v477 = vshll.u32 %v456, 16
    %v479 = vrot.slane %v477, 1
    %v480 = vsel %vm74, %v475, %v479
    %481 = vrot.lane.b32.xlu0 %v468, 16
    %v482 = vpop.permute.xlu0 %481
    %483 = vrot.lane.b32.xlu0 %v480, 16
    %v484 = vpop.permute.xlu0 %483
    %v489 = vrot.slane %v453, 1
    %v490 = vrot.slane %v455, 1
    %v491 = vsel %vm107, %v489, %v490
    %v492 = vrot.slane %v454, 1
    %v493 = vrot.slane %v456, 1
    %v494 = vsel %vm107, %v492, %v493
    %495 = vrot.lane.b32.xlu0 %v491, 32
    %v496 = vpop.permute.xlu0 %495
    %497 = vrot.lane.b32.xlu0 %v494, 32
    %v498 = vpop.permute.xlu0 %497
    %v499 = vrot.slane %v458, 1
    %v500 = vrot.slane %v460, 2
    %v501 = vor.u32 %v499, %v500
    %v502 = vshrl.u32 %v455, 16
    %v504 = vrot.slane %v502, 1
    %v505 = vrot.slane %v465, 2
    %v506 = vor.u32 %v504, %v505
    %v507 = vsel %vm272, %v501, %v506
    %v508 = vrot.slane %v470, 1
    %v509 = vrot.slane %v472, 2
    %v510 = vor.u32 %v508, %v509
    %v511 = vshrl.u32 %v456, 16
    %v513 = vrot.slane %v511, 1
    %v514 = vrot.slane %v477, 2
    %v515 = vor.u32 %v513, %v514
    %v516 = vsel %vm272, %v510, %v515
    %517 = vrot.lane.b32.xlu0 %v507, 48
    %v518 = vpop.permute.xlu0 %517
    %519 = vrot.lane.b32.xlu0 %v516, 48
    %v520 = vpop.permute.xlu0 %519
    %v521 = vrot.slane %v453, 2
    %v522 = vrot.slane %v455, 2
    %v523 = vsel %vm295, %v521, %v522
    %v524 = vrot.slane %v454, 2
    %v525 = vrot.slane %v456, 2
    %v526 = vsel %vm295, %v524, %v525
    %527 = vrot.lane.b32.xlu0 %v523, 64
    %v528 = vpop.permute.xlu0 %527
    %529 = vrot.lane.b32.xlu0 %v526, 64
    %v530 = vpop.permute.xlu0 %529
    %vm531 = vsmask.f32 5376
    %v532 = vrot.slane %v458, 2
    %v533 = vrot.slane %v460, 3
    %v534 = vor.u32 %v532, %v533
    %v535 = vrot.slane %v502, 2
    %v536 = vrot.slane %v465, 3
    %v537 = vor.u32 %v535, %v536
    %v538 = vsel %vm531, %v534, %v537
    %v539 = vrot.slane %v470, 2
    %v540 = vrot.slane %v472, 3
    %v541 = vor.u32 %v539, %v540
    %v542 = vrot.slane %v511, 2
    %v543 = vrot.slane %v477, 3
    %v544 = vor.u32 %v542, %v543
    %v545 = vsel %vm531, %v541, %v544
    %546 = vrot.lane.b32.xlu0 %v538, 80
    %v547 = vpop.permute.xlu0 %546
    %548 = vrot.lane.b32.xlu0 %v545, 80
    %v549 = vpop.permute.xlu0 %548
    %vm550 = vcmask 1044480
    %v551 = vrot.slane %v453, 3
    %v552 = vrot.slane %v455, 3
    %v553 = vsel %vm550, %v551, %v552
    %v554 = vrot.slane %v454, 3
    %v555 = vrot.slane %v456, 3
    %v556 = vsel %vm550, %v554, %v555
    %557 = vrot.lane.b32.xlu0 %v553, 96
    %v558 = vpop.permute.xlu0 %557
    %559 = vrot.lane.b32.xlu0 %v556, 96
    %v560 = vpop.permute.xlu0 %559
    %v562 = vsel %vm310, %v453, %v482
    %v564 = vsel %vm310, %v454, %v484
    %v566 = vsel %vm320, %v562, %v496
    %v568 = vsel %vm320, %v564, %v498
    %vm569 = vcmask 392192
    %v571 = vsel %vm569, %v566, %v518
    %v573 = vsel %vm569, %v568, %v520
    %vm574 = vcmask 523264
    %v576 = vsel %vm574, %v571, %v528
    %v578 = vsel %vm574, %v573, %v530
    %vm579 = vcmask 654336
    %v581 = vsel %vm579, %v576, %v547
    %v583 = vsel %vm579, %v578, %v549
    %vm584 = vcmask 785408
    %v586 = vsel %vm584, %v581, %v558
    %v588 = vsel %vm584, %v583, %v560
    %v589 = vld [vmem:[%s5] sm:$0xf]
    %v590 = vld [vmem:[%s5 + $0x4] sm:$0xf]
    %v591 = vld [vmem:[%s5 + $0x8] sm:$0xf]
    %v592 = vld [vmem:[%s5 + $0xc] sm:$0xf]
    %v593 = vld [vmem:[%s5 + $0x10] sm:$0xf]
    %v594 = vld [vmem:[%s5 + $0x14] sm:$0xf]
    %v595 = vld [vmem:[%s5 + $0x18] sm:$0xf]
    %v596 = vld [vmem:[%s5 + $0x1c] sm:$0xf]
    %v597 = vld [vmem:[%s5 + $0x20] sm:$0xf]
    %v598 = vld [vmem:[%s5 + $0x24] sm:$0xf]
    %v599 = vld [vmem:[%s5 + $0x28] sm:$0xf]
    %v600 = vld [vmem:[%s5 + $0x2c] sm:$0xf]
    %v601 = vld [vmem:[%s5 + $0x30] sm:$0xf]
    %v602 = vld [vmem:[%s5 + $0x34] sm:$0xf]
    %v603 = vld [vmem:[%s6] sm:$0x1]
    %v605 = vlaneseq
    %v606 = vshrl.u32 %v605, 7
    %v607 = vsub.s32 0, %v606
    %v608 = vrot.slane %v603, %v607
    %v624 = vunpack.c.l.b16 %v589
    %v625 = vunpack.c.l.b16 %v590
    %v626 = vunpack.c.l.b16 %v591
    %v627 = vunpack.c.l.b16 %v592
    %v628 = vunpack.c.l.b16 %v593
    %v629 = vunpack.c.l.b16 %v594
    %v630 = vunpack.c.l.b16 %v595
    %v631 = vunpack.c.l.b16 %v596
    %v632 = vunpack.c.l.b16 %v597
    %v633 = vunpack.c.l.b16 %v598
    %v634 = vunpack.c.l.b16 %v599
    %v635 = vunpack.c.l.b16 %v600
    %v636 = vunpack.c.l.b16 %v601
    %v637 = vunpack.c.l.b16 %v602
    %v638 = vpack.c.b16 %v625, %v624
    %v639 = vpack.c.b16 %v627, %v626
    %v640 = vpack.c.b16 %v629, %v628
    %v641 = vpack.c.b16 %v631, %v630
    %v642 = vpack.c.b16 %v633, %v632
    %v643 = vpack.c.b16 %v635, %v634
    %v644 = vpack.c.b16 %v637, %v636
    %vm652 = vcmask 916480
    %v653 = vsel %vm652, %v586, 0
    %v655 = vsel %vm652, %v588, 0
    %657 = vmatprep.subr.bf16.mxu0 0
    %658 = vmatpush1.bf16.msra.mxu0 0
    %659 = vmatprep.subr.bf16.mxu0 0
    %660 = vmatpush1.bf16.msra.mxu0 %v644
    %661 = vmatprep.subr.bf16.mxu0 0
    %662 = vmatpush1.bf16.msra.mxu0 %v643
    %663 = vmatprep.subr.bf16.mxu0 0
    %664 = vmatpush1.bf16.msra.mxu0 %v642
    %665 = vmatprep.subr.bf16.mxu0 0
    %666 = vmatpush1.bf16.msra.mxu0 %v641
    %667 = vmatprep.subr.bf16.mxu0 0
    %668 = vmatpush1.bf16.msra.mxu0 %v640
    %669 = vmatprep.subr.bf16.mxu0 0
    %670 = vmatpush1.bf16.msra.mxu0 %v639
    %671 = vmatprep.subr.bf16.mxu0 0
    %672 = vmatpush1.bf16.msra.mxu0 %v638
    %673 = vmatprep.subr.bf16.mxu0 0
    %674 = vmatpush2.bf16.msra.mxu0 0
    %675 = vmatprep.subr.bf16.mxu0 0
    %676 = vmatpush2.bf16.msra.mxu0 0
    %677 = vmatprep.subr.bf16.mxu0 0
    %678 = vmatpush2.bf16.msra.mxu0 0
    %679 = vmatprep.subr.bf16.mxu0 0
    %680 = vmatpush2.bf16.msra.mxu0 0
    %681 = vmatprep.subr.bf16.mxu0 0
    %682 = vmatpush2.bf16.msra.mxu0 0
    %683 = vmatprep.subr.bf16.mxu0 0
    %684 = vmatpush2.bf16.msra.mxu0 0
    %685 = vmatprep.subr.bf16.mxu0 0
    %686 = vmatpush2.bf16.msra.mxu0 0
    %687 = vmatprep.subr.bf16.mxu0 0
    %688 = vmatpush2.bf16.msra.mxu0 0
    %689 = vmatprep.mubr.bf16.mxu0 0
    %690 = vmatmul.mubr.bf16.gmra.mxu0 %v653
    %v691 = vpop.f32.mrf.mxu0
    %v692 = vadd.f32 %v608, %v691
    %v693 = vpop.f32.mrf.mxu0
    %v694 = vpop.f32.mrf.mxu0
    %v695 = vadd.f32 %v608, %v694
    %v696 = vpop.f32.mrf.mxu0
    %697 = vmatprep.mubr.bf16.mxu0 0
    %698 = vmatmul.mubr.bf16.gmra.mxu0 %v655
    %v699 = vpop.f32.mrf.mxu0
    %v700 = vadd.f32 %v608, %v699
    %v701 = vpop.f32.mrf.mxu0
    %v702 = vpop.f32.mrf.mxu0
    %v703 = vadd.f32 %v608, %v702
    %v704 = vpop.f32.mrf.mxu0
    %705 = vdwg.mxu0
    %v706 = vmul.f32 %v692, 0.5
    %v707 = vmul.f32 %v695, 0.5
    %v708 = vmul.f32 %v700, 0.5
    %v709 = vmul.f32 %v703, 0.5
    %v710 = vmul.f32 %v692, 0.70710677
    %v711 = vmul.f32 %v695, 0.70710677
    %v712 = vmul.f32 %v700, 0.70710677
    %v713 = vmul.f32 %v703, 0.70710677
    %v714 = verf.f32.pop %v710
    %v715 = verf.f32.pop %v711
    %v716 = verf.f32.pop %v712
    %v717 = verf.f32.pop %v713
    %v718 = vadd.f32 %v714, 1.0
    %v719 = vadd.f32 %v715, 1.0
    %v720 = vadd.f32 %v716, 1.0
    %v721 = vadd.f32 %v717, 1.0
    %v722 = vmul.f32 %v706, %v718
    %v723 = vmul.f32 %v707, %v719
    %v724 = vmul.f32 %v708, %v720
    %v725 = vmul.f32 %v709, %v721
    %v726 = vsel %vm320, %v722, 0.0
    %v727 = vsel %vm320, %v723, 0.0
    %v728 = vadd.f32 %v726, %v727
    %v729 = vrot.slane %v728, 4
    %v730 = vadd.f32 %v728, %v729
    %v731 = vrot.slane %v730, 2
    %v732 = vadd.f32 %v730, %v731
    %v733 = vrot.slane %v732, 1
    %v734 = vadd.f32 %v732, %v733
    %v735 = vsel %vm320, %v724, 0.0
    %v736 = vsel %vm320, %v725, 0.0
    %v737 = vadd.f32 %v735, %v736
    %v738 = vrot.slane %v737, 4
    %v739 = vadd.f32 %v737, %v738
    %v740 = vrot.slane %v739, 2
    %v741 = vadd.f32 %v739, %v740
    %v742 = vrot.slane %v741, 1
    %v743 = vadd.f32 %v741, %v742
    %v744 = vrcp.pop 16.0
    %v745 = vmul.f32 %v734, %v744
    %v746 = vmul.f32 %v743, %v744
    %v747 = vsel %vm320, %v722, -inf
    %v748 = vsel %vm320, %v723, -inf
    %v749 = vmax.f32 %v747, %v748
    %v750 = vrot.slane %v749, 4
    %v751 = vmax.f32 %v749, %v750
    %v752 = vrot.slane %v751, 2
    %v753 = vmax.f32 %v751, %v752
    %v754 = vrot.slane %v753, 1
    %v755 = vmax.f32 %v753, %v754
    %v756 = vsel %vm320, %v724, -inf
    %v757 = vsel %vm320, %v725, -inf
    %v758 = vmax.f32 %v756, %v757
    %v759 = vrot.slane %v758, 4
    %v760 = vmax.f32 %v758, %v759
    %v761 = vrot.slane %v760, 2
    %v762 = vmax.f32 %v760, %v761
    %v763 = vrot.slane %v762, 1
    %v764 = vmax.f32 %v762, %v763
    %v765 = vpack.c.bf16 %v745, %v745
    %v766 = vpack.c.bf16 %v746, %v746
    %v767 = vld [vmem:[%s7] sm:$0xf]
    %v768 = vld [vmem:[%s7 + $0x4] sm:$0xf]
    %v769 = vld [vmem:[%s7 + $0x8] sm:$0xf]
    %v770 = vld [vmem:[%s7 + $0xc] sm:$0xf]
    %v771 = vpack.c.bf16 %v755, %v755
    %v772 = vpack.c.bf16 %v764, %v764
    %v773 = vld [vmem:[%s8] sm:$0xf]
    %v774 = vld [vmem:[%s8 + $0x4] sm:$0xf]
    %v775 = vld [vmem:[%s8 + $0x8] sm:$0xf]
    %v776 = vld [vmem:[%s8 + $0xc] sm:$0xf]
    %v779 = vunpack.c.l.b16 %v771
    %v780 = vunpack.c.l.b16 %v772
    %vm781 = vcmask 1041409
    %v782 = vsel %vm781, %v780, %v779
    %v783 = vpack.c.b16 %v782, %v782
    %v788 = vunpack.c.l.b16 %v773
    %v789 = vunpack.c.l.b16 %v774
    %v790 = vunpack.c.l.b16 %v775
    %v791 = vunpack.c.l.b16 %v776
    %v792 = vpack.c.b16 %v789, %v788
    %v793 = vpack.c.b16 %v791, %v790
    %v797 = vsel %vm320, %v783, 0
    %799 = vmatprep.subr.bf16.mxu0 0
    %800 = vmatpush1.bf16.msra.mxu0 0
    %801 = vmatprep.subr.bf16.mxu0 0
    %802 = vmatpush1.bf16.msra.mxu0 0
    %803 = vmatprep.subr.bf16.mxu0 0
    %804 = vmatpush1.bf16.msra.mxu0 0
    %805 = vmatprep.subr.bf16.mxu0 0
    %806 = vmatpush1.bf16.msra.mxu0 0
    %807 = vmatprep.subr.bf16.mxu0 0
    %808 = vmatpush1.bf16.msra.mxu0 0
    %809 = vmatprep.subr.bf16.mxu0 0
    %810 = vmatpush1.bf16.msra.mxu0 0
    %811 = vmatprep.subr.bf16.mxu0 0
    %812 = vmatpush1.bf16.msra.mxu0 %v793
    %813 = vmatprep.subr.bf16.mxu0 0
    %814 = vmatpush1.bf16.msra.mxu0 %v792
    %815 = vmatprep.subr.bf16.mxu0 0
    %816 = vmatpush2.bf16.msra.mxu0 0
    %817 = vmatprep.subr.bf16.mxu0 0
    %818 = vmatpush2.bf16.msra.mxu0 0
    %819 = vmatprep.subr.bf16.mxu0 0
    %820 = vmatpush2.bf16.msra.mxu0 0
    %821 = vmatprep.subr.bf16.mxu0 0
    %822 = vmatpush2.bf16.msra.mxu0 0
    %823 = vmatprep.subr.bf16.mxu0 0
    %824 = vmatpush2.bf16.msra.mxu0 0
    %825 = vmatprep.subr.bf16.mxu0 0
    %826 = vmatpush2.bf16.msra.mxu0 0
    %827 = vmatprep.subr.bf16.mxu0 0
    %828 = vmatpush2.bf16.msra.mxu0 0
    %829 = vmatprep.subr.bf16.mxu0 0
    %830 = vmatpush2.bf16.msra.mxu0 0
    %831 = vmatprep.mubr.bf16.mxu0 0
    %832 = vmatmul.mubr.bf16.gmra.mxu0 %v797
    %v833 = vpop.f32.mrf.mxu0
    %v834 = vadd.f32 0.0, %v833
    %v835 = vpop.f32.mrf.mxu0
    %v836 = vpop.f32.mrf.mxu0
    %v837 = vpop.f32.mrf.mxu0
    %838 = vdwg.mxu0
    %v841 = vunpack.c.l.b16 %v765
    %v842 = vunpack.c.l.b16 %v766
    %v843 = vsel %vm781, %v842, %v841
    %v844 = vpack.c.b16 %v843, %v843
    %v849 = vunpack.c.l.b16 %v767
    %v850 = vunpack.c.l.b16 %v768
    %v851 = vunpack.c.l.b16 %v769
    %v852 = vunpack.c.l.b16 %v770
    %v853 = vpack.c.b16 %v850, %v849
    %v854 = vpack.c.b16 %v852, %v851
    %v858 = vsel %vm320, %v844, 0
    %860 = vmatprep.subr.bf16.mxu0 0
    %861 = vmatpush1.bf16.msra.mxu0 0
    %862 = vmatprep.subr.bf16.mxu0 0
    %863 = vmatpush1.bf16.msra.mxu0 0
    %864 = vmatprep.subr.bf16.mxu0 0
    %865 = vmatpush1.bf16.msra.mxu0 0
    %866 = vmatprep.subr.bf16.mxu0 0
    %867 = vmatpush1.bf16.msra.mxu0 0
    %868 = vmatprep.subr.bf16.mxu0 0
    %869 = vmatpush1.bf16.msra.mxu0 0
    %870 = vmatprep.subr.bf16.mxu0 0
    %871 = vmatpush1.bf16.msra.mxu0 0
    %872 = vmatprep.subr.bf16.mxu0 0
    %873 = vmatpush1.bf16.msra.mxu0 %v854
    %874 = vmatprep.subr.bf16.mxu0 0
    %875 = vmatpush1.bf16.msra.mxu0 %v853
    %876 = vmatprep.subr.bf16.mxu0 0
    %877 = vmatpush2.bf16.msra.mxu0 0
    %878 = vmatprep.subr.bf16.mxu0 0
    %879 = vmatpush2.bf16.msra.mxu0 0
    %880 = vmatprep.subr.bf16.mxu0 0
    %881 = vmatpush2.bf16.msra.mxu0 0
    %882 = vmatprep.subr.bf16.mxu0 0
    %883 = vmatpush2.bf16.msra.mxu0 0
    %884 = vmatprep.subr.bf16.mxu0 0
    %885 = vmatpush2.bf16.msra.mxu0 0
    %886 = vmatprep.subr.bf16.mxu0 0
    %887 = vmatpush2.bf16.msra.mxu0 0
    %888 = vmatprep.subr.bf16.mxu0 0
    %889 = vmatpush2.bf16.msra.mxu0 0
    %890 = vmatprep.subr.bf16.mxu0 0
    %891 = vmatpush2.bf16.msra.mxu0 0
    %892 = vmatprep.mubr.bf16.mxu0 0
    %893 = vmatmul.mubr.bf16.gmra.mxu0 %v858
    %v894 = vpop.f32.mrf.mxu0
    %v895 = vadd.f32 %v834, %v894
    %v896 = vpop.f32.mrf.mxu0
    %v897 = vpop.f32.mrf.mxu0
    %v898 = vpop.f32.mrf.mxu0
    %899 = vdwg.mxu0
    %v900 = vld [vmem:[%s9] sm:$0x1]
    %v902 = vlaneseq
    %v903 = vshrl.u32 %v902, 7
    %v904 = vsub.s32 0, %v903
    %v905 = vrot.slane %v900, %v904
    %v907 = vadd.f32 %v895, %v905
    %v908 = vmax.f32 %v907, 0.0
    %v909 = vpack.c.bf16 %v908, %v908
    %v910 = vld [vmem:[%s10] sm:$0xf]
    %v911 = vld [vmem:[%s10 + $0x4] sm:$0xf]
    %v912 = vld [vmem:[%s10 + $0x8] sm:$0xf]
    %v913 = vld [vmem:[%s10 + $0xc] sm:$0xf]
    %v914 = vld [vmem:[%s11] sm:$0x1]
    %v916 = vlaneseq
    %v917 = vshrl.u32 %v916, 7
    %v918 = vsub.s32 0, %v917
    %v919 = vrot.slane %v914, %v918
    %v925 = vunpack.c.l.b16 %v910
    %v926 = vunpack.c.l.b16 %v911
    %v927 = vunpack.c.l.b16 %v912
    %v928 = vunpack.c.l.b16 %v913
    %v929 = vpack.c.b16 %v926, %v925
    %v930 = vpack.c.b16 %v928, %v927
    %v934 = vsel %vm320, %v909, 0
    %936 = vmatprep.subr.bf16.mxu0 0
    %937 = vmatpush1.bf16.msra.mxu0 0
    %938 = vmatprep.subr.bf16.mxu0 0
    %939 = vmatpush1.bf16.msra.mxu0 0
    %940 = vmatprep.subr.bf16.mxu0 0
    %941 = vmatpush1.bf16.msra.mxu0 0
    %942 = vmatprep.subr.bf16.mxu0 0
    %943 = vmatpush1.bf16.msra.mxu0 0
    %944 = vmatprep.subr.bf16.mxu0 0
    %945 = vmatpush1.bf16.msra.mxu0 0
    %946 = vmatprep.subr.bf16.mxu0 0
    %947 = vmatpush1.bf16.msra.mxu0 0
    %948 = vmatprep.subr.bf16.mxu0 0
    %949 = vmatpush1.bf16.msra.mxu0 %v930
    %950 = vmatprep.subr.bf16.mxu0 0
    %951 = vmatpush1.bf16.msra.mxu0 %v929
    %952 = vmatprep.subr.bf16.mxu0 0
    %953 = vmatpush2.bf16.msra.mxu0 0
    %954 = vmatprep.subr.bf16.mxu0 0
    %955 = vmatpush2.bf16.msra.mxu0 0
    %956 = vmatprep.subr.bf16.mxu0 0
    %957 = vmatpush2.bf16.msra.mxu0 0
    %958 = vmatprep.subr.bf16.mxu0 0
    %959 = vmatpush2.bf16.msra.mxu0 0
    %960 = vmatprep.subr.bf16.mxu0 0
    %961 = vmatpush2.bf16.msra.mxu0 0
    %962 = vmatprep.subr.bf16.mxu0 0
    %963 = vmatpush2.bf16.msra.mxu0 0
    %964 = vmatprep.subr.bf16.mxu0 0
    %965 = vmatpush2.bf16.msra.mxu0 0
    %966 = vmatprep.subr.bf16.mxu0 0
    %967 = vmatpush2.bf16.msra.mxu0 0
    %968 = vmatprep.mubr.bf16.mxu0 0
    %969 = vmatmul.mubr.bf16.gmra.mxu0 %v934
    %v970 = vpop.f32.mrf.mxu0
    %v971 = vadd.f32 %v919, %v970
    %v972 = vpop.f32.mrf.mxu0
    %v973 = vpop.f32.mrf.mxu0
    %v974 = vpop.f32.mrf.mxu0
    %975 = vdwg.mxu0
    %vm976 = vcmask 254976
    %977 = vst.msk [vmem:[#allocation2] sm:$0x3] %vm976, %v971
    // Predicated region
    $region50: #{tpu_custom_call.1} parent=1 // pred_check
      _
    $region51: #{tpu_custom_call.1} parent=1 // pred_check_branch
      %979 = sbr.rel (0) target = $region53
    $region52: #{tpu_custom_call.1} parent=1 // pred_region
      %s981 = ssub.s32 32, 32
      %982 = vsyncadd [#allocation3], %s981
      %s984 = sshll.u32 [#allocation2], 4
      %s985 = int_to_ptr.vmem [resolvable:$true] %s984
      %987 = dma.vmem_to_hbm [thread:$0]  %s985, 32, %s12, [#allocation3]
    $region53: #{tpu_custom_call.1} parent=1 // pred_fallthru
      _
    // Predicated region
    $region54: #{tpu_custom_call.1} parent=1 // pred_check
      _
    $region55: #{tpu_custom_call.1} parent=1 // pred_check_branch
      %989 = sbr.rel (0) target = $region57
    $region56: #{tpu_custom_call.1} parent=1 // pred_region
      %990 = dma.done [#allocation3], 32
    $region57: #{tpu_custom_call.1} parent=1 // pred_fallthru
      _
    %991 = vsyncpa [#allocation3], 1

</llo_original>
